<compile_context>
chip_gen: v7x
topology: tpu7x:2x2x1
jax: 0.10.0
libtpu: 0.0.40
codegen_flags: <defaults>
</compile_context>

<pallas_src>
import functools

import jax
import jax.numpy as jnp
from jax.experimental import pallas as pl
from jax.experimental.pallas import tpu as pltpu

_LANE = 128
_SUBLANE = 8


def _round_up(v: int, m: int) -> int:
    return ((v + m - 1) // m) * m


def _cdiv(a: int, b: int) -> int:
    return (a + b - 1) // b


# ----------------------------------------------------------------------------
# Kernel
# ----------------------------------------------------------------------------
def _make_fused_kernel(n_layers: int):
    """One batch tile: chained matmul + bias + tanh over the fused MLP."""

    def kernel(*refs):
        # refs layout: [x_tile, (W, b) * n_layers, out_tile]
        x_ref = refs[0]
        out_ref = refs[1 + 2 * n_layers]

        h = x_ref[...]
        for i in range(n_layers):
            w_ref = refs[1 + 2 * i]
            b_ref = refs[2 + 2 * i]
            # Operands in the weights' dtype (bf16 by default -> bf16-native
            # MXU), accumulate in f32.
            acc = jnp.dot(h.astype(w_ref.dtype), w_ref[...],
                          preferred_element_type=jnp.float32)
            acc = acc + b_ref[...]            # f32 bias add (VPU)
            if i < n_layers - 1:
                acc = jnp.tanh(acc)           # f32 tanh (EUP slot)
            h = acc
        out_ref[...] = h.astype(out_ref.dtype)

    return kernel


# ----------------------------------------------------------------------------
# Parameter fusion (done ONCE per parameter set, not per forward call)
# ----------------------------------------------------------------------------
def fuse_dynamic_learner_params(f_params, B_params, *,
                                compute_dtype=jnp.bfloat16):
    """Fuse the two MLPs into one block-diagonal/concatenated MLP.

    Column order of every layer is [B-branch | f-branch] so the B slice of the
    final slab starts at lane 0.  Hidden and output widths are zero-padded to
    multiples of 128 lanes (exact: padded pre-activations are 0, tanh(0)=0,
    and padded rows of the next layer are 0).  Weights are cast to
    `compute_dtype`; biases stay f32.

    Returns a list of (W:(in_pad, out_pad), b:(1, out_pad)).
    """
    assert len(f_params) == len(B_params), "f and B must have the same depth"
    n_layers = len(f_params)

    fused = []
    prev_pad = None  # padded output width of previous layer
    for i in range(n_layers):
        Wf, bf = f_params[i]
        WB, bB = B_params[i]
        Wf = jnp.asarray(Wf, jnp.float32)
        WB = jnp.asarray(WB, jnp.float32)

        if i == 0:
            # Both branches consume x: concatenate along output axis, B first.
            W = jnp.concatenate([WB, Wf], axis=1)
            in_pad = W.shape[0]                      # x_dim, no row padding
        else:
            in_B, out_B = WB.shape
            in_f, out_f = Wf.shape
            W = jnp.zeros((in_B + in_f, out_B + out_f), jnp.float32)
            W = W.at[:in_B, :out_B].set(WB)
            W = W.at[in_B:, out_B:].set(Wf)
            in_pad = prev_pad                        # pad rows to prev width

        b = jnp.concatenate([jnp.asarray(bB, jnp.float32),
                             jnp.asarray(bf, jnp.float32)], axis=1)

        out_w = W.shape[1]
        out_pad = _round_up(out_w, _LANE)
        W = jnp.pad(W, ((0, in_pad - W.shape[0]), (0, out_pad - out_w)))
        b = jnp.pad(b, ((0, 0), (0, out_pad - out_w)))

        fused.append((W.astype(compute_dtype), b))
        prev_pad = out_pad
    return fused


# ----------------------------------------------------------------------------
# Forward over the fused params
# ----------------------------------------------------------------------------
def fused_forward(x, fused_params, *, block_rows=4096):
    """Run the fused MLP over a batch-tiled parallel grid.

    Returns the lane-dense slab of shape (n, out_pad) in the compute dtype.
    """
    n, x_dim_in = x.shape
    n_layers = len(fused_params)
    out_pad = fused_params[-1][0].shape[1]
    out_dtype = fused_params[-1][0].dtype

    # ---- batch tile selection -------------------------------------------
    n_r = _round_up(n, _SUBLANE)
    tm = _round_up(min(block_rows, n_r), _SUBLANE)
    # Keep >= 2 grid steps when the batch allows it, so v7x's two TensorCores
    # both get work (dimension_semantics=("parallel",) shards grid steps).
    if n_r // tm < 2 and n_r > _SUBLANE:
        tm = _round_up(_cdiv(n_r, 2), _SUBLANE)
    n_pad = _cdiv(n, tm) * tm
    x_in = jnp.pad(x, ((0, n_pad - n), (0, 0))) if n_pad != n else x

    # ---- specs ------------------------------------------------------------
    flat_inputs = [x_in]
    in_specs = [pl.BlockSpec((tm, x_dim_in), lambda i: (i, 0))]
    for W, b in fused_params:
        flat_inputs += [W, b]
        # Constant block index -> weights fetched once, stay resident in VMEM.
        in_specs += [pl.BlockSpec(W.shape, lambda i: (0, 0)),
                     pl.BlockSpec(b.shape, lambda i: (0, 0))]

    # ---- VMEM estimate (double-buffered x/out tiles + resident weights) ---
    bytes_x = tm * x_dim_in * x_in.dtype.itemsize
    bytes_out = tm * out_pad * jnp.dtype(out_dtype).itemsize
    bytes_w = sum(W.size * W.dtype.itemsize + b.size * b.dtype.itemsize
                  for W, b in fused_params)
    bytes_h = 3 * tm * out_pad * 4                   # f32 intermediates slack
    vmem_est = 2 * (bytes_x + bytes_out) + bytes_w + bytes_h
    cp_kwargs = dict(dimension_semantics=("parallel",))
    if vmem_est > (14 << 20):
        # v5e's default scoped-VMEM limit is 16 MiB; raise it explicitly.
        cp_kwargs["vmem_limit_bytes"] = int(min(vmem_est + (4 << 20), 64 << 20))

    slab = pl.pallas_call(
        _make_fused_kernel(n_layers),
        out_shape=jax.ShapeDtypeStruct((n_pad, out_pad), out_dtype),
        grid=(n_pad // tm,),
        in_specs=in_specs,
        out_specs=pl.BlockSpec((tm, out_pad), lambda i: (i, 0)),
        compiler_params=pltpu.CompilerParams(**cp_kwargs),
    )(*flat_inputs)

    return slab[:n]


def make_dynamic_learner_forward(f_params, B_params, x_dim, action_dim, *,
                                 compute_dtype=jnp.bfloat16, block_rows=4096):
    """Fuse params once and return a jitted forward(x) -> (f, B)."""
    fused = fuse_dynamic_learner_params(f_params, B_params,
                                        compute_dtype=compute_dtype)
    n_B = x_dim * action_dim

    @jax.jit
    def forward(x):
        slab = fused_forward(x, fused, block_rows=block_rows)
        n = x.shape[0]
        # B occupies lanes [0, x_dim*action_dim) -> lane-aligned slice+reshape.
        B = slab[:, :n_B].reshape(n, x_dim, action_dim).astype(x.dtype)
        f = slab[:, n_B:n_B + x_dim].astype(x.dtype)
        return f, B

    return forward


def dynamic_learner_forward(x, f_params, B_params, x_dim, action_dim, *,
                            compute_dtype=jnp.bfloat16, block_rows=4096):
    """One-shot convenience wrapper. Prefer make_dynamic_learner_forward for
    repeated calls (it fuses the params only once)."""
    fwd = make_dynamic_learner_forward(f_params, B_params, x_dim, action_dim,
                                       compute_dtype=compute_dtype,
                                       block_rows=block_rows)
    return fwd(x)


# ----------------------------------------------------------------------------
# Synthetic params + pure-JAX reference
# ----------------------------------------------------------------------------
def init_mlp_params(key, in_dim, hidden_dims, out_dim, dtype=jnp.float32):
    """Deterministic synthetic params. Returns list of (W:(in,out), b:(1,out))."""
    dims = [in_dim] + list(hidden_dims) + [out_dim]
    params = []
    for i in range(len(dims) - 1):
        key, kw, kb = jax.random.split(key, 3)
        W = jax.random.normal(kw, (dims[i], dims[i + 1]), dtype) * 0.1
        b = jax.random.normal(kb, (1, dims[i + 1]), dtype) * 0.01
        params.append((W, b))
    return params


def reference_forward(x, f_params, B_params, x_dim, action_dim):
    """Pure-JAX reference mirroring the PyTorch module (eval mode)."""
    def mlp(h, params):
        for i, (W, b) in enumerate(params):
            h = h @ W + b
            if i < len(params) - 1:
                h = jnp.tanh(h)
        return h
    f = mlp(x, f_params)
    B = mlp(x, B_params).reshape(x.shape[0], x_dim, action_dim)
    return f, B


if __name__ == "__main__":
    # Shapes consistent with the module: x_dim=16, action_dim=4,
    # hidden_dim=[32, 32], drop_out=None, activation=Tanh.
    batch, x_dim, action_dim = 8, 16, 4
    hidden_dim = [32, 32]

    key = jax.random.PRNGKey(0)
    kx, kf, kb = jax.random.split(key, 3)

    x = jax.random.normal(kx, (batch, x_dim), jnp.float32)
    f_params = init_mlp_params(kf, x_dim, hidden_dim, x_dim)
    B_params = init_mlp_params(kb, x_dim, hidden_dim, x_dim * action_dim)
    f_ref, B_ref = reference_forward(x, f_params, B_params, x_dim, action_dim)

    # ---- f32 compute path: exact-ish check -------------------------------
    fwd_f32 = make_dynamic_learner_forward(f_params, B_params, x_dim,
                                           action_dim,
                                           compute_dtype=jnp.float32)
    f_out, B_out = fwd_f32(x)
    f_out = jax.block_until_ready(f_out)
    B_out = jax.block_until_ready(B_out)
    assert f_out.shape == (batch, x_dim)
    assert B_out.shape == (batch, x_dim, action_dim)
    assert jnp.allclose(f_out, f_ref, atol=1e-5, rtol=1e-5)
    assert jnp.allclose(B_out, B_ref, atol=1e-5, rtol=1e-5)

    # ---- default bf16 compute path: loose tolerance -----------------------
    fwd_bf16 = make_dynamic_learner_forward(f_params, B_params, x_dim,
                                            action_dim)
    f_bf, B_bf = fwd_bf16(x)
    f_bf = jax.block_until_ready(f_bf)
    B_bf = jax.block_until_ready(B_bf)
    assert jnp.allclose(f_bf, f_ref, atol=5e-2, rtol=5e-2)
    assert jnp.allclose(B_bf, B_ref, atol=5e-2, rtol=5e-2)

    # ---- batch not a multiple of the tile: row padding + multi-step grid --
    batch2 = 200
    x2 = jax.random.normal(jax.random.PRNGKey(1), (batch2, x_dim), jnp.float32)
    f2_ref, B2_ref = reference_forward(x2, f_params, B_params, x_dim,
                                       action_dim)

    fwd2_f32 = make_dynamic_learner_forward(f_params, B_params, x_dim,
                                            action_dim,
                                            compute_dtype=jnp.float32,
                                            block_rows=64)
    f2, B2 = fwd2_f32(x2)
    f2 = jax.block_until_ready(f2)
    B2 = jax.block_until_ready(B2)
    assert jnp.allclose(f2, f2_ref, atol=1e-5, rtol=1e-5)
    assert jnp.allclose(B2, B2_ref, atol=1e-5, rtol=1e-5)

    f2b, B2b = fwd_bf16(x2)   # default block_rows -> >=2 grid steps for v7x
    f2b = jax.block_until_ready(f2b)
    B2b = jax.block_until_ready(B2b)
    assert jnp.allclose(f2b, f2_ref, atol=5e-2, rtol=5e-2)
    assert jnp.allclose(B2b, B2_ref, atol=5e-2, rtol=5e-2)

    print("KERNEL_OK")
</pallas_src>

<mosaic_0001>
module attributes {stable_mosaic.version = 11 : i64} {
  func.func @kernel(%arg0: i32, %arg1: memref<8x16xf32, #tpu.memory_space<vmem>>, %arg2: memref<16x128xf32, #tpu.memory_space<vmem>>, %arg3: memref<1x128xf32, #tpu.memory_space<vmem>>, %arg4: memref<128x128xf32, #tpu.memory_space<vmem>>, %arg5: memref<1x128xf32, #tpu.memory_space<vmem>>, %arg6: memref<128x128xf32, #tpu.memory_space<vmem>>, %arg7: memref<1x128xf32, #tpu.memory_space<vmem>>, %arg8: memref<8x128xf32, #tpu.memory_space<vmem>>) attributes {dimension_semantics = [#tpu.dimension_semantics<parallel>], iteration_bounds = array<i64: 1>, scalar_prefetch = 0 : i64, scratch_operands = 0 : i64, tpu.core_type = #tpu.core_type<tc>, window_params = [{transform_indices = @transform_0, window_bounds = array<i64: 8, 16>}, {pipeline_mode = #tpu.pipeline_mode<synchronous>, transform_indices = @transform_1, window_bounds = array<i64: 16, 128>}, {pipeline_mode = #tpu.pipeline_mode<synchronous>, transform_indices = @transform_2, window_bounds = array<i64: 1, 128>}, {pipeline_mode = #tpu.pipeline_mode<synchronous>, transform_indices = @transform_3, window_bounds = array<i64: 128, 128>}, {pipeline_mode = #tpu.pipeline_mode<synchronous>, transform_indices = @transform_4, window_bounds = array<i64: 1, 128>}, {pipeline_mode = #tpu.pipeline_mode<synchronous>, transform_indices = @transform_5, window_bounds = array<i64: 128, 128>}, {pipeline_mode = #tpu.pipeline_mode<synchronous>, transform_indices = @transform_6, window_bounds = array<i64: 1, 128>}, {transform_indices = @transform_7, window_bounds = array<i64: 8, 128>}]} {
    %c0 = arith.constant 0 : index
    %c0_0 = arith.constant 0 : index
    %0 = vector.load %arg1[%c0, %c0_0] : memref<8x16xf32, #tpu.memory_space<vmem>>, vector<8x16xf32>
    %c0_1 = arith.constant 0 : index
    %c0_2 = arith.constant 0 : index
    %1 = vector.load %arg2[%c0_1, %c0_2] : memref<16x128xf32, #tpu.memory_space<vmem>>, vector<16x128xf32>
    %cst = arith.constant dense<0.000000e+00> : vector<8x128xf32>
    %2 = tpu.matmul %0, %1, %cst {dimension_numbers = #tpu.dot_dimension_numbers<[1], [0], [0], [1], [0, 0, 1, 1], [], []>} : vector<8x16xf32>, vector<16x128xf32>, vector<8x128xf32> -> vector<8x128xf32>
    %c0_3 = arith.constant 0 : index
    %c0_4 = arith.constant 0 : index
    %3 = vector.load %arg3[%c0_3, %c0_4] : memref<1x128xf32, #tpu.memory_space<vmem>>, vector<1x128xf32>
    %4 = vector.broadcast %3 : vector<1x128xf32> to vector<8x128xf32>
    %5 = arith.addf %2, %4 : vector<8x128xf32>
    %6 = math.tanh %5 : vector<8x128xf32>
    %c0_5 = arith.constant 0 : index
    %c0_6 = arith.constant 0 : index
    %7 = vector.load %arg4[%c0_5, %c0_6] : memref<128x128xf32, #tpu.memory_space<vmem>>, vector<128x128xf32>
    %cst_7 = arith.constant dense<0.000000e+00> : vector<8x128xf32>
    %8 = tpu.matmul %6, %7, %cst_7 {dimension_numbers = #tpu.dot_dimension_numbers<[1], [0], [0], [1], [0, 0, 1, 1], [], []>} : vector<8x128xf32>, vector<128x128xf32>, vector<8x128xf32> -> vector<8x128xf32>
    %c0_8 = arith.constant 0 : index
    %c0_9 = arith.constant 0 : index
    %9 = vector.load %arg5[%c0_8, %c0_9] : memref<1x128xf32, #tpu.memory_space<vmem>>, vector<1x128xf32>
    %10 = vector.broadcast %9 : vector<1x128xf32> to vector<8x128xf32>
    %11 = arith.addf %8, %10 : vector<8x128xf32>
    %12 = math.tanh %11 : vector<8x128xf32>
    %c0_10 = arith.constant 0 : index
    %c0_11 = arith.constant 0 : index
    %13 = vector.load %arg6[%c0_10, %c0_11] : memref<128x128xf32, #tpu.memory_space<vmem>>, vector<128x128xf32>
    %cst_12 = arith.constant dense<0.000000e+00> : vector<8x128xf32>
    %14 = tpu.matmul %12, %13, %cst_12 {dimension_numbers = #tpu.dot_dimension_numbers<[1], [0], [0], [1], [0, 0, 1, 1], [], []>} : vector<8x128xf32>, vector<128x128xf32>, vector<8x128xf32> -> vector<8x128xf32>
    %c0_13 = arith.constant 0 : index
    %c0_14 = arith.constant 0 : index
    %15 = vector.load %arg7[%c0_13, %c0_14] : memref<1x128xf32, #tpu.memory_space<vmem>>, vector<1x128xf32>
    %16 = vector.broadcast %15 : vector<1x128xf32> to vector<8x128xf32>
    %17 = arith.addf %14, %16 : vector<8x128xf32>
    %c0_15 = arith.constant 0 : index
    %c0_16 = arith.constant 0 : index
    %18 = vector.load %arg8[%c0_15, %c0_16] : memref<8x128xf32, #tpu.memory_space<vmem>>, vector<8x128xf32>
    tpu.vector_store %arg8[%c0_15, %c0_16], %17 {strides = array<i32>} : memref<8x128xf32, #tpu.memory_space<vmem>>, vector<8x128xf32>,
    return
  }
  func.func @transform_0(%arg0: i32) -> (i32, i32) {
    %c0_i32 = arith.constant 0 : i32
    %c0_i32_0 = arith.constant 0 : i32
    return %arg0, %c0_i32 : i32, i32
  }
  func.func @transform_1(%arg0: i32) -> (i32, i32) {
    %c0_i32 = arith.constant 0 : i32
    %c0_i32_0 = arith.constant 0 : i32
    %c0_i32_1 = arith.constant 0 : i32
    return %c0_i32, %c0_i32_0 : i32, i32
  }
  func.func @transform_2(%arg0: i32) -> (i32, i32) {
    %c0_i32 = arith.constant 0 : i32
    %c0_i32_0 = arith.constant 0 : i32
    %c0_i32_1 = arith.constant 0 : i32
    return %c0_i32, %c0_i32_0 : i32, i32
  }
  func.func @transform_3(%arg0: i32) -> (i32, i32) {
    %c0_i32 = arith.constant 0 : i32
    %c0_i32_0 = arith.constant 0 : i32
    %c0_i32_1 = arith.constant 0 : i32
    return %c0_i32, %c0_i32_0 : i32, i32
  }
  func.func @transform_4(%arg0: i32) -> (i32, i32) {
    %c0_i32 = arith.constant 0 : i32
    %c0_i32_0 = arith.constant 0 : i32
    %c0_i32_1 = arith.constant 0 : i32
    return %c0_i32, %c0_i32_0 : i32, i32
  }
  func.func @transform_5(%arg0: i32) -> (i32, i32) {
    %c0_i32 = arith.constant 0 : i32
    %c0_i32_0 = arith.constant 0 : i32
    %c0_i32_1 = arith.constant 0 : i32
    return %c0_i32, %c0_i32_0 : i32, i32
  }
  func.func @transform_6(%arg0: i32) -> (i32, i32) {
    %c0_i32 = arith.constant 0 : i32
    %c0_i32_0 = arith.constant 0 : i32
    %c0_i32_1 = arith.constant 0 : i32
    return %c0_i32, %c0_i32_0 : i32, i32
  }
  func.func @transform_7(%arg0: i32) -> (i32, i32) {
    %c0_i32 = arith.constant 0 : i32
    %c0_i32_0 = arith.constant 0 : i32
    return %arg0, %c0_i32 : i32, i32
  }
}

</mosaic_0001>

<llo_original>
// kernel: forward.1
$region0: #{forward.1}
  #allocation0 [shape = 'u32[]', space=smem, size = 0x4, offset = 0x4, fixed_abs, tag = 'smem constant byte address 0x4 - core index']
  #allocation1 [shape = 'u32[144,128]{1,0:T(1,128)}', space=vmem, size = 0x12000, scoped, tag = 'internal scratch']
  %s0 = inlined_call_operand.hbm [shape: f32[8,16], index: 0, kind: input, shape index: {}]
  %s1 = inlined_call_operand.hbm [shape: f32[16,128], index: 1, kind: input, shape index: {}]
  %s2 = inlined_call_operand.vmem [shape: f32[1,128], index: 2, kind: input, shape index: {}]
  %s3 = inlined_call_operand.hbm [shape: f32[128,128], index: 3, kind: input, shape index: {}]
  %s4 = inlined_call_operand.vmem [shape: f32[1,128], index: 4, kind: input, shape index: {}]
  %s5 = inlined_call_operand.hbm [shape: f32[128,128], index: 5, kind: input, shape index: {}]
  %s6 = inlined_call_operand.vmem [shape: f32[1,128], index: 6, kind: input, shape index: {}]
  %s7 = inlined_call_operand.vmem [shape: f32[8,128], index: 7, kind: output, shape index: {}]
  %s8 = sld [smem:[#allocation0]]
  $region54: #{forward.1} parent=0
    _
  %s10 = ssub.s32 1, %s8
  %s11 = scalar_select 0, %s10, %s8
  $region1: #{forward.1} parent=0
    #allocation2 [shape = 'u8[4096]{0}', space=vmem, size = 0x1000, scoped, tag = 'input window, operand 0, single buffered']
    #allocation3 [shape = 's32[1]{0}', space=sflag, size = 0x4, scoped, tag = 'scoped memory for forward.1']
    #allocation4 [shape = 'u8[8192]{0}', space=vmem, size = 0x2000, scoped, tag = 'input window, operand 1, single buffered']
    #allocation5 [shape = 's32[1]{0}', space=sflag, size = 0x4, scoped, tag = 'scoped memory for forward.1']
    #allocation6 [shape = 'u8[65536]{0}', space=vmem, size = 0x10000, scoped, tag = 'input window, operand 3, single buffered']
    #allocation7 [shape = 'u8[65536]{0}', space=vmem, size = 0x10000, scoped, tag = 'input window, operand 5, single buffered']
    #allocation8 [shape = 's32[1]{0}', space=sflag, size = 0x4, scoped, tag = 'scoped memory for forward.1']
    %12 = vsyncpa [#allocation3], 0
    %13 = vsyncpa [#allocation5], 0
    %14 = vsyncpa [#allocation8], 0
    // Predicated region
    $region2: #{forward.1} parent=1 // pred_check
      _
    $region3: #{forward.1} parent=1 // pred_check_branch
      %16 = sbr.rel (0) target = $region5
    $region4: #{forward.1} parent=1 // pred_region
      %s18 = ssub.s32 128, 128
      %19 = vsyncadd [#allocation3], %s18
      %s21 = sshll.u32 [#allocation2], 4
      %s22 = int_to_ptr.vmem [resolvable:$true] %s21
      %24 = dma.hbm_to_vmem [thread:$0]  %s0, 128, %s22, [#allocation3]
    $region5: #{forward.1} parent=1 // pred_fallthru
      _
    // Predicated region
    $region6: #{forward.1} parent=1 // pred_check
      _
    $region7: #{forward.1} parent=1 // pred_check_branch
      %26 = sbr.rel (0) target = $region9
    $region8: #{forward.1} parent=1 // pred_region
      %s28 = ssub.s32 256, 256
      %29 = vsyncadd [#allocation5], %s28
      %s30 = sshll.u32 [#allocation4], 4
      %s31 = int_to_ptr.vmem [resolvable:$true] %s30
      %36 = dma.hbm_to_vmem [thread:$0]  %s1, 256, %s31, [#allocation5], 128, 128, 8
    $region9: #{forward.1} parent=1 // pred_fallthru
      _
    // Predicated region
    $region10: #{forward.1} parent=1 // pred_check
      _
    $region11: #{forward.1} parent=1 // pred_check_branch
      %38 = sbr.rel (0) target = $region13
    $region12: #{forward.1} parent=1 // pred_region
      _
    $region13: #{forward.1} parent=1 // pred_fallthru
      _
    // Predicated region
    $region14: #{forward.1} parent=1 // pred_check
      _
    $region15: #{forward.1} parent=1 // pred_check_branch
      %40 = sbr.rel (0) target = $region17
    $region16: #{forward.1} parent=1 // pred_region
      %s42 = ssub.s32 2048, 2048
      %43 = vsyncadd [#allocation5], %s42
      %s44 = sshll.u32 [#allocation6], 4
      %s45 = int_to_ptr.vmem [resolvable:$true] %s44
      %50 = dma.hbm_to_vmem [thread:$0]  %s3, 2048, %s45, [#allocation5], 128, 128, 8
    $region17: #{forward.1} parent=1 // pred_fallthru
      _
    // Predicated region
    $region18: #{forward.1} parent=1 // pred_check
      _
    $region19: #{forward.1} parent=1 // pred_check_branch
      %52 = sbr.rel (0) target = $region21
    $region20: #{forward.1} parent=1 // pred_region
      _
    $region21: #{forward.1} parent=1 // pred_fallthru
      _
    // Predicated region
    $region22: #{forward.1} parent=1 // pred_check
      _
    $region23: #{forward.1} parent=1 // pred_check_branch
      %54 = sbr.rel (0) target = $region25
    $region24: #{forward.1} parent=1 // pred_region
      %s56 = ssub.s32 2048, 2048
      %57 = vsyncadd [#allocation8], %s56
      %s58 = sshll.u32 [#allocation7], 4
      %s59 = int_to_ptr.vmem [resolvable:$true] %s58
      %64 = dma.hbm_to_vmem [thread:$0]  %s5, 2048, %s59, [#allocation8], 128, 128, 8
    $region25: #{forward.1} parent=1 // pred_fallthru
      _
    // Predicated region
    $region26: #{forward.1} parent=1 // pred_check
      _
    $region27: #{forward.1} parent=1 // pred_check_branch
      %66 = sbr.rel (0) target = $region29
    $region28: #{forward.1} parent=1 // pred_region
      _
    $region29: #{forward.1} parent=1 // pred_fallthru
      _
    // Predicated region
    $region30: #{forward.1} parent=1 // pred_check
      _
    $region31: #{forward.1} parent=1 // pred_check_branch
      %68 = sbr.rel (0) target = $region33
    $region32: #{forward.1} parent=1 // pred_region
      %69 = dma.done [#allocation3], 128
    $region33: #{forward.1} parent=1 // pred_fallthru
      _
    // Predicated region
    $region34: #{forward.1} parent=1 // pred_check
      _
    $region35: #{forward.1} parent=1 // pred_check_branch
      %71 = sbr.rel (0) target = $region37
    $region36: #{forward.1} parent=1 // pred_region
      %72 = dma.done [#allocation5], 256
    $region37: #{forward.1} parent=1 // pred_fallthru
      _
    // Predicated region
    $region38: #{forward.1} parent=1 // pred_check
      _
    $region39: #{forward.1} parent=1 // pred_check_branch
      %74 = sbr.rel (0) target = $region41
    $region40: #{forward.1} parent=1 // pred_region
      %75 = dma.done [#allocation5], 2048
    $region41: #{forward.1} parent=1 // pred_fallthru
      _
    // Predicated region
    $region42: #{forward.1} parent=1 // pred_check
      _
    $region43: #{forward.1} parent=1 // pred_check_branch
      %77 = sbr.rel (0) target = $region45
    $region44: #{forward.1} parent=1 // pred_region
      %78 = dma.done [#allocation8], 2048
    $region45: #{forward.1} parent=1 // pred_fallthru
      _
    %v79 = vld [vmem:[#allocation2] sm:$0xff]
    %v80 = vld [vmem:[#allocation4] sm:$0xff]
    %v81 = vld [vmem:[#allocation4 + $0x8] sm:$0xff]
    %v82 = vld [vmem:[%s2] sm:$0x1]
    %v84 = vlaneseq
    %v85 = vshrl.u32 %v84, 7
    %v86 = vsub.s32 0, %v85
    %v87 = vrot.slane %v82, %v86
    %vm89 = vcmask 130048
    %v91 = vsel %vm89, %v79, 0
    %93 = vmatprep.subr.mxu0 0.0
    %94 = vmatpush1.msra.mxu0 %v80
    %95 = vmatprep.subr.mxu0 0.0
    %96 = vmatpush1.msra.mxu0 %v81
    %97 = vmatprep.subr.mxu0 0.0
    %98 = vmatpush1.msra.mxu0 0.0
    %99 = vmatprep.subr.mxu0 0.0
    %100 = vmatpush1.msra.mxu0 0.0
    %101 = vmatprep.subr.mxu0 0.0
    %102 = vmatpush1.msra.mxu0 0.0
    %103 = vmatprep.subr.mxu0 0.0
    %104 = vmatpush1.msra.mxu0 0.0
    %105 = vmatprep.subr.mxu0 0.0
    %106 = vmatpush1.msra.mxu0 0.0
    %107 = vmatprep.subr.mxu0 0.0
    %108 = vmatpush1.msra.mxu0 0.0
    %109 = vmatprep.subr.mxu0 0.0
    %110 = vmatpush1.msra.mxu0 0.0
    %111 = vmatprep.subr.mxu0 0.0
    %112 = vmatpush1.msra.mxu0 0.0
    %113 = vmatprep.subr.mxu0 0.0
    %114 = vmatpush1.msra.mxu0 0.0
    %115 = vmatprep.subr.mxu0 0.0
    %116 = vmatpush1.msra.mxu0 0.0
    %117 = vmatprep.subr.mxu0 0.0
    %118 = vmatpush1.msra.mxu0 0.0
    %119 = vmatprep.subr.mxu0 0.0
    %120 = vmatpush1.msra.mxu0 0.0
    %121 = vmatprep.subr.mxu0 0.0
    %122 = vmatpush1.msra.mxu0 0.0
    %123 = vmatprep.subr.mxu0 0.0
    %124 = vmatpush1.msra.mxu0 0.0
    %125 = vmatprep.subr.mxu0 0.0
    %126 = vmatpush1.msra.mxu0 0.0
    %127 = vmatprep.subr.mxu0 0.0
    %128 = vmatpush1.msra.mxu0 0.0
    %129 = vmatprep.subr.mxu0 0.0
    %130 = vmatpush1.msra.mxu0 0.0
    %131 = vmatprep.subr.mxu0 0.0
    %132 = vmatpush1.msra.mxu0 0.0
    %133 = vmatprep.subr.mxu0 0.0
    %134 = vmatpush1.msra.mxu0 0.0
    %135 = vmatprep.subr.mxu0 0.0
    %136 = vmatpush1.msra.mxu0 0.0
    %137 = vmatprep.subr.mxu0 0.0
    %138 = vmatpush1.msra.mxu0 0.0
    %139 = vmatprep.subr.mxu0 0.0
    %140 = vmatpush1.msra.mxu0 0.0
    %141 = vmatprep.subr.mxu0 0.0
    %142 = vmatpush1.msra.mxu0 0.0
    %143 = vmatprep.subr.mxu0 0.0
    %144 = vmatpush1.msra.mxu0 0.0
    %145 = vmatprep.subr.mxu0 0.0
    %146 = vmatpush1.msra.mxu0 0.0
    %147 = vmatprep.subr.mxu0 0.0
    %148 = vmatpush1.msra.mxu0 0.0
    %149 = vmatprep.subr.mxu0 0.0
    %150 = vmatpush1.msra.mxu0 0.0
    %151 = vmatprep.subr.mxu0 0.0
    %152 = vmatpush1.msra.mxu0 0.0
    %153 = vmatprep.subr.mxu0 0.0
    %154 = vmatpush1.msra.mxu0 0.0
    %155 = vmatprep.subr.mxu0 0.0
    %156 = vmatpush1.msra.mxu0 0.0
    %157 = vmatprep.mubr.f32.mxu0 0.0
    %158 = vmatmul.mubr.f32.gmra.mrb[0].mxu0 %v91
    %v159 = vpop.f32.mrb[0].mxu0
    %v160 = vadd.f32 %v87, %v159
    %v161 = vpop.f32.mrb[0].mxu0
    %162 = vdwg.mxu0
    %v163 = vtanh.pop %v160
    %v164 = vld [vmem:[#allocation6] sm:$0xff]
    %v165 = vld [vmem:[#allocation6 + $0x8] sm:$0xff]
    %v166 = vld [vmem:[#allocation6 + $0x10] sm:$0xff]
    %v167 = vld [vmem:[#allocation6 + $0x18] sm:$0xff]
    %v168 = vld [vmem:[#allocation6 + $0x20] sm:$0xff]
    %v169 = vld [vmem:[#allocation6 + $0x28] sm:$0xff]
    %v170 = vld [vmem:[#allocation6 + $0x30] sm:$0xff]
    %v171 = vld [vmem:[#allocation6 + $0x38] sm:$0xff]
    %v172 = vld [vmem:[#allocation6 + $0x40] sm:$0xff]
    %v173 = vld [vmem:[#allocation6 + $0x48] sm:$0xff]
    %v174 = vld [vmem:[#allocation6 + $0x50] sm:$0xff]
    %v175 = vld [vmem:[#allocation6 + $0x58] sm:$0xff]
    %v176 = vld [vmem:[#allocation6 + $0x60] sm:$0xff]
    %v177 = vld [vmem:[#allocation6 + $0x68] sm:$0xff]
    %v178 = vld [vmem:[#allocation6 + $0x70] sm:$0xff]
    %v179 = vld [vmem:[#allocation6 + $0x78] sm:$0xff]
    %v180 = vld [vmem:[%s4] sm:$0x1]
    %v182 = vlaneseq
    %v183 = vshrl.u32 %v182, 7
    %v184 = vsub.s32 0, %v183
    %v185 = vrot.slane %v180, %v184
    %187 = vmatprep.subr.mxu0 0.0
    %188 = vmatpush1.msra.mxu0 %v164
    %189 = vmatprep.subr.mxu0 0.0
    %190 = vmatpush1.msra.mxu0 %v165
    %191 = vmatprep.subr.mxu0 0.0
    %192 = vmatpush1.msra.mxu0 %v166
    %193 = vmatprep.subr.mxu0 0.0
    %194 = vmatpush1.msra.mxu0 %v167
    %195 = vmatprep.subr.mxu0 0.0
    %196 = vmatpush1.msra.mxu0 %v168
    %197 = vmatprep.subr.mxu0 0.0
    %198 = vmatpush1.msra.mxu0 %v169
    %199 = vmatprep.subr.mxu0 0.0
    %200 = vmatpush1.msra.mxu0 %v170
    %201 = vmatprep.subr.mxu0 0.0
    %202 = vmatpush1.msra.mxu0 %v171
    %203 = vmatprep.subr.mxu0 0.0
    %204 = vmatpush1.msra.mxu0 %v172
    %205 = vmatprep.subr.mxu0 0.0
    %206 = vmatpush1.msra.mxu0 %v173
    %207 = vmatprep.subr.mxu0 0.0
    %208 = vmatpush1.msra.mxu0 %v174
    %209 = vmatprep.subr.mxu0 0.0
    %210 = vmatpush1.msra.mxu0 %v175
    %211 = vmatprep.subr.mxu0 0.0
    %212 = vmatpush1.msra.mxu0 %v176
    %213 = vmatprep.subr.mxu0 0.0
    %214 = vmatpush1.msra.mxu0 %v177
    %215 = vmatprep.subr.mxu0 0.0
    %216 = vmatpush1.msra.mxu0 %v178
    %217 = vmatprep.subr.mxu0 0.0
    %218 = vmatpush1.msra.mxu0 %v179
    %219 = vmatprep.subr.mxu0 0.0
    %220 = vmatpush1.msra.mxu0 0.0
    %221 = vmatprep.subr.mxu0 0.0
    %222 = vmatpush1.msra.mxu0 0.0
    %223 = vmatprep.subr.mxu0 0.0
    %224 = vmatpush1.msra.mxu0 0.0
    %225 = vmatprep.subr.mxu0 0.0
    %226 = vmatpush1.msra.mxu0 0.0
    %227 = vmatprep.subr.mxu0 0.0
    %228 = vmatpush1.msra.mxu0 0.0
    %229 = vmatprep.subr.mxu0 0.0
    %230 = vmatpush1.msra.mxu0 0.0
    %231 = vmatprep.subr.mxu0 0.0
    %232 = vmatpush1.msra.mxu0 0.0
    %233 = vmatprep.subr.mxu0 0.0
    %234 = vmatpush1.msra.mxu0 0.0
    %235 = vmatprep.subr.mxu0 0.0
    %236 = vmatpush1.msra.mxu0 0.0
    %237 = vmatprep.subr.mxu0 0.0
    %238 = vmatpush1.msra.mxu0 0.0
    %239 = vmatprep.subr.mxu0 0.0
    %240 = vmatpush1.msra.mxu0 0.0
    %241 = vmatprep.subr.mxu0 0.0
    %242 = vmatpush1.msra.mxu0 0.0
    %243 = vmatprep.subr.mxu0 0.0
    %244 = vmatpush1.msra.mxu0 0.0
    %245 = vmatprep.subr.mxu0 0.0
    %246 = vmatpush1.msra.mxu0 0.0
    %247 = vmatprep.subr.mxu0 0.0
    %248 = vmatpush1.msra.mxu0 0.0
    %249 = vmatprep.subr.mxu0 0.0
    %250 = vmatpush1.msra.mxu0 0.0
    %251 = vmatprep.mubr.f32.mxu0 0.0
    %252 = vmatmul.mubr.f32.gmra.mrb[0].mxu0 %v163
    %v253 = vpop.f32.mrb[0].mxu0
    %v254 = vadd.f32 %v185, %v253
    %v255 = vpop.f32.mrb[0].mxu0
    %256 = vdwg.mxu0
    %v257 = vtanh.pop %v254
    %v258 = vld [vmem:[#allocation7] sm:$0xff]
    %v259 = vld [vmem:[#allocation7 + $0x8] sm:$0xff]
    %v260 = vld [vmem:[#allocation7 + $0x10] sm:$0xff]
    %v261 = vld [vmem:[#allocation7 + $0x18] sm:$0xff]
    %v262 = vld [vmem:[#allocation7 + $0x20] sm:$0xff]
    %v263 = vld [vmem:[#allocation7 + $0x28] sm:$0xff]
    %v264 = vld [vmem:[#allocation7 + $0x30] sm:$0xff]
    %v265 = vld [vmem:[#allocation7 + $0x38] sm:$0xff]
    %v266 = vld [vmem:[#allocation7 + $0x40] sm:$0xff]
    %v267 = vld [vmem:[#allocation7 + $0x48] sm:$0xff]
    %v268 = vld [vmem:[#allocation7 + $0x50] sm:$0xff]
    %v269 = vld [vmem:[#allocation7 + $0x58] sm:$0xff]
    %v270 = vld [vmem:[#allocation7 + $0x60] sm:$0xff]
    %v271 = vld [vmem:[#allocation7 + $0x68] sm:$0xff]
    %v272 = vld [vmem:[#allocation7 + $0x70] sm:$0xff]
    %v273 = vld [vmem:[#allocation7 + $0x78] sm:$0xff]
    %v274 = vld [vmem:[%s6] sm:$0x1]
    %v276 = vlaneseq
    %v277 = vshrl.u32 %v276, 7
    %v278 = vsub.s32 0, %v277
    %v279 = vrot.slane %v274, %v278
    %281 = vmatprep.subr.mxu0 0.0
    %282 = vmatpush1.msra.mxu0 %v258
    %283 = vmatprep.subr.mxu0 0.0
    %284 = vmatpush1.msra.mxu0 %v259
    %285 = vmatprep.subr.mxu0 0.0
    %286 = vmatpush1.msra.mxu0 %v260
    %287 = vmatprep.subr.mxu0 0.0
    %288 = vmatpush1.msra.mxu0 %v261
    %289 = vmatprep.subr.mxu0 0.0
    %290 = vmatpush1.msra.mxu0 %v262
    %291 = vmatprep.subr.mxu0 0.0
    %292 = vmatpush1.msra.mxu0 %v263
    %293 = vmatprep.subr.mxu0 0.0
    %294 = vmatpush1.msra.mxu0 %v264
    %295 = vmatprep.subr.mxu0 0.0
    %296 = vmatpush1.msra.mxu0 %v265
    %297 = vmatprep.subr.mxu0 0.0
    %298 = vmatpush1.msra.mxu0 %v266
    %299 = vmatprep.subr.mxu0 0.0
    %300 = vmatpush1.msra.mxu0 %v267
    %301 = vmatprep.subr.mxu0 0.0
    %302 = vmatpush1.msra.mxu0 %v268
    %303 = vmatprep.subr.mxu0 0.0
    %304 = vmatpush1.msra.mxu0 %v269
    %305 = vmatprep.subr.mxu0 0.0
    %306 = vmatpush1.msra.mxu0 %v270
    %307 = vmatprep.subr.mxu0 0.0
    %308 = vmatpush1.msra.mxu0 %v271
    %309 = vmatprep.subr.mxu0 0.0
    %310 = vmatpush1.msra.mxu0 %v272
    %311 = vmatprep.subr.mxu0 0.0
    %312 = vmatpush1.msra.mxu0 %v273
    %313 = vmatprep.subr.mxu0 0.0
    %314 = vmatpush1.msra.mxu0 0.0
    %315 = vmatprep.subr.mxu0 0.0
    %316 = vmatpush1.msra.mxu0 0.0
    %317 = vmatprep.subr.mxu0 0.0
    %318 = vmatpush1.msra.mxu0 0.0
    %319 = vmatprep.subr.mxu0 0.0
    %320 = vmatpush1.msra.mxu0 0.0
    %321 = vmatprep.subr.mxu0 0.0
    %322 = vmatpush1.msra.mxu0 0.0
    %323 = vmatprep.subr.mxu0 0.0
    %324 = vmatpush1.msra.mxu0 0.0
    %325 = vmatprep.subr.mxu0 0.0
    %326 = vmatpush1.msra.mxu0 0.0
    %327 = vmatprep.subr.mxu0 0.0
    %328 = vmatpush1.msra.mxu0 0.0
    %329 = vmatprep.subr.mxu0 0.0
    %330 = vmatpush1.msra.mxu0 0.0
    %331 = vmatprep.subr.mxu0 0.0
    %332 = vmatpush1.msra.mxu0 0.0
    %333 = vmatprep.subr.mxu0 0.0
    %334 = vmatpush1.msra.mxu0 0.0
    %335 = vmatprep.subr.mxu0 0.0
    %336 = vmatpush1.msra.mxu0 0.0
    %337 = vmatprep.subr.mxu0 0.0
    %338 = vmatpush1.msra.mxu0 0.0
    %339 = vmatprep.subr.mxu0 0.0
    %340 = vmatpush1.msra.mxu0 0.0
    %341 = vmatprep.subr.mxu0 0.0
    %342 = vmatpush1.msra.mxu0 0.0
    %343 = vmatprep.subr.mxu0 0.0
    %344 = vmatpush1.msra.mxu0 0.0
    %345 = vmatprep.mubr.f32.mxu0 0.0
    %346 = vmatmul.mubr.f32.gmra.mrb[0].mxu0 %v257
    %v347 = vpop.f32.mrb[0].mxu0
    %v348 = vadd.f32 %v279, %v347
    %v349 = vpop.f32.mrb[0].mxu0
    %350 = vdwg.mxu0
    %351 = vst [vmem:[%s7] sm:$0xff] %v348
    // Predicated region
    $region46: #{forward.1} parent=1 // pred_check
      _
    $region47: #{forward.1} parent=1 // pred_check_branch
      %353 = sbr.rel (0) target = $region49
    $region48: #{forward.1} parent=1 // pred_region
      _
    $region49: #{forward.1} parent=1 // pred_fallthru
      _
    // Predicated region
    $region50: #{forward.1} parent=1 // pred_check
      _
    $region51: #{forward.1} parent=1 // pred_check_branch
      %355 = sbr.rel (0) target = $region53
    $region52: #{forward.1} parent=1 // pred_region
      _
    $region53: #{forward.1} parent=1 // pred_fallthru
      _
    %356 = vsyncpa [#allocation3], 1
    %357 = vsyncpa [#allocation5], 1
    %358 = vsyncpa [#allocation8], 1

</llo_original>
